<compile_context>
chip_gen: v7x
topology: tpu7x:2x2x1
jax: 0.10.0
libtpu: 0.0.40
codegen_flags: <defaults>
</compile_context>

<pallas_src>
import jax
import jax.numpy as jnp
from jax.experimental import pallas as pl
from jax.experimental.pallas import tpu as pltpu


def _drop_path_kernel(keep_ref, scale_ref, x_ref, o_ref):
    # keep_ref : (B,) int32 SMEM   -- only used by the input index_map (DMA skip).
    # scale_ref: (B,) float32 SMEM -- 0.0 (dropped) or 1/keep_prob (kept).
    b = pl.program_id(0)
    scale = scale_ref[b].astype(o_ref.dtype)
    # Native-dtype elementwise multiply; purely DMA-bound streaming.
    o_ref[...] = x_ref[...] * scale


def _ceil_to(a, m):
    return ((a + m - 1) // m) * m


def _vmem_budget():
    """Pick (block_bytes cap, vmem_limit_bytes) per TPU generation."""
    try:
        cap = int(pltpu.get_tpu_info().vmem_capacity_bytes)
    except Exception:
        cap = 64 << 20  # conservative (v7x-sized) fallback
    # 2 in + 2 out double-buffered blocks must fit comfortably under the limit.
    block_bytes = min(8 << 20, cap // 8)           # 8 MiB on all current gens
    vmem_limit = int(max(32 << 20, min(cap - (16 << 20), 64 << 20)))
    return block_bytes, vmem_limit


def _choose_layout(n, itemsize, batch, block_bytes, lane_cap=4096, min_grid_steps=8):
    """Factor the flattened per-sample size n into a padded (R, C) layout plus
    a row tile TR.  C is always a multiple of 128 (lane-dense, unmasked vst);
    TR is a multiple of the dtype's sublane pack (or the full row extent);
    TR*C*itemsize <= block_bytes.  Returns (R, C, TR, n_pad)."""
    step = max(8, 32 // max(1, itemsize))  # 8 for f32, 16 for bf16, 32 for int8/fp8

    # ---- lane (C) selection ----
    if n % 128 == 0:
        c = 128
        m = 256
        while m <= lane_cap:
            if n % m == 0:
                c = m
            m += 128
    elif n <= lane_cap:
        c = _ceil_to(n, 128)           # single padded row
    else:
        c = 1024                       # generic lane-dense width (8 vregs)
    r_raw = -(-n // c)                 # ceil(n / c)

    # ---- row tile (TR) + row padding ----
    max_rows = max(step, (block_bytes // (c * itemsize)) // step * step)
    if r_raw <= max_rows:
        r = r_raw
        cands = sorted(set(d for d in range(step, r + 1, step) if r % d == 0) | {r})
        fitting = [d for d in cands if d <= max_rows] or [cands[0]]
        tr = fitting[-1]
    else:
        # Split into k near-equal, step-aligned tiles; pad rows up to k*tr.
        k = -(-r_raw // max_rows)
        tr = _ceil_to(-(-r_raw // k), step)
        r = k * tr

    # Ensure enough grid steps to overlap the pipeline / feed both v7x cores.
    while batch * (r // tr) < min_grid_steps and tr > step:
        smaller = [d for d in range(step, tr, step) if r % d == 0]
        if not smaller:
            break
        tr = smaller[-1]

    return r, c, tr, r * c


def drop_path(x, seed=0, drop_prob: float = 0.0, training: bool = False,
              scale_by_keep: bool = True):
    """Pallas implementation of DropPath forward. x: (B, ...).

    NOTE: the drop mask is deterministic in `seed`; vary `seed` per call /
    per layer (e.g. jax.random.fold_in) to mirror PyTorch's global RNG draw.
    """
    if drop_prob == 0.0 or not training:
        return x
    keep_prob = 1.0 - drop_prob
    B = x.shape[0]
    n = 1
    for d in x.shape[1:]:
        n *= d

    # Per-sample keep decision and scale, computed once in the wrapper.
    key = jax.random.PRNGKey(seed)
    keep_bool = jax.random.bernoulli(key, p=keep_prob, shape=(B,))
    keep = keep_bool.astype(jnp.int32)
    kept_scale = (1.0 / keep_prob) if (scale_by_keep and keep_prob > 0.0) else 1.0
    scale = jnp.where(keep_bool, jnp.float32(kept_scale), jnp.float32(0.0))

    itemsize = jnp.dtype(x.dtype).itemsize
    block_bytes, vmem_limit = _vmem_budget()
    R, C, TR, n_pad = _choose_layout(n, itemsize, B, block_bytes)

    xf = x.reshape(B, n)
    if n_pad != n:
        xf = jnp.pad(xf, ((0, 0), (0, n_pad - n)))
    xr = xf.reshape(B, R, C)

    out = pl.pallas_call(
        _drop_path_kernel,
        out_shape=jax.ShapeDtypeStruct((B, R, C), x.dtype),
        grid_spec=pltpu.PrefetchScalarGridSpec(
            num_scalar_prefetch=2,
            grid=(B, R // TR),
            # Dropped samples (keep==0) map every row-tile to input block 0 of
            # that sample, so the pipeline skips the redundant input DMAs.
            in_specs=[pl.BlockSpec((1, TR, C),
                                   lambda b, t, keep, scale: (b, t * keep[b], 0))],
            out_specs=pl.BlockSpec((1, TR, C),
                                   lambda b, t, keep, scale: (b, t, 0)),
        ),
        compiler_params=pltpu.CompilerParams(
            dimension_semantics=("parallel", "parallel"),
            vmem_limit_bytes=vmem_limit),
    )(keep, scale, xr)

    out = out.reshape(B, n_pad)
    if n_pad != n:
        out = out[:, :n]
    return out.reshape(x.shape)


class DropPath:
    """Mirror of the PyTorch DropPath module (forward only)."""

    def __init__(self, drop_prob: float = 0.0, scale_by_keep: bool = True):
        self.drop_prob = drop_prob
        self.scale_by_keep = scale_by_keep
        self.training = True

    def __call__(self, x, seed=0):
        return drop_path(x, seed, self.drop_prob, self.training, self.scale_by_keep)


if __name__ == "__main__":
    key = jax.random.PRNGKey(0)
    B, L, D = 2, 8, 32
    x = jax.random.normal(key, (B, L, D), dtype=jnp.float32)

    module = DropPath(drop_prob=0.25, scale_by_keep=True)
    keep_prob = 1.0 - module.drop_prob

    # Training mode: per-sample stochastic depth.
    y_train = jax.block_until_ready(module(x, seed=123))
    for b in range(B):
        xb, yb = x[b], y_train[b]
        zeroed = bool(jnp.allclose(yb, 0.0))
        scaled = bool(jnp.allclose(yb, xb / keep_prob, rtol=1e-5, atol=1e-5))
        assert zeroed or scaled, f"sample {b}: output is neither dropped nor scaled"

    # Odd-shaped 4D input (flattened size not a multiple of 128) exercises the
    # wrapper-side padding path.
    x2 = jax.random.normal(jax.random.PRNGKey(1), (2, 4, 5, 7), dtype=jnp.float32)
    y2 = jax.block_until_ready(module(x2, seed=7))
    for b in range(x2.shape[0]):
        zeroed = bool(jnp.allclose(y2[b], 0.0))
        scaled = bool(jnp.allclose(y2[b], x2[b] / keep_prob, rtol=1e-5, atol=1e-5))
        assert zeroed or scaled, f"4D sample {b}: bad drop-path output"

    # bfloat16 activations exercise the dtype-aware tiling + native-dtype scale.
    x3 = jax.random.normal(jax.random.PRNGKey(2), (2, 16, 128), dtype=jnp.bfloat16)
    y3 = jax.block_until_ready(module(x3, seed=9))
    for b in range(x3.shape[0]):
        yb = y3[b].astype(jnp.float32)
        xb = x3[b].astype(jnp.float32)
        zeroed = bool(jnp.allclose(yb, 0.0))
        scaled = bool(jnp.allclose(yb, xb / keep_prob, rtol=2e-2, atol=2e-2))
        assert zeroed or scaled, f"bf16 sample {b}: bad drop-path output"

    # Eval mode (training=False): identity.
    module.training = False
    y_eval = jax.block_until_ready(module(x, seed=123))
    assert bool(jnp.allclose(y_eval, x)), "eval mode must be identity"

    print("KERNEL_OK")
</pallas_src>

<mosaic_0001>
module attributes {stable_mosaic.version = 11 : i64} {
  func.func @_drop_path_kernel(%arg0: i32, %arg1: i32, %arg2: memref<2xi32, #tpu.memory_space<smem>>, %arg3: memref<2xf32, #tpu.memory_space<smem>>, %arg4: memref<1x1x256xf32, #tpu.memory_space<vmem>>, %arg5: memref<1x1x256xf32, #tpu.memory_space<vmem>>) attributes {dimension_semantics = [#tpu.dimension_semantics<parallel>, #tpu.dimension_semantics<parallel>], iteration_bounds = array<i64: 2, 1>, scalar_prefetch = 2 : i64, scratch_operands = 0 : i64, tpu.core_type = #tpu.core_type<tc>, window_params = [{transform_indices = @transform_0, window_bounds = array<i64: 1, 1, 256>}, {transform_indices = @transform_1, window_bounds = array<i64: 1, 1, 256>}]} {
    %0 = arith.index_cast %arg0 : i32 to index
    %1 = memref.load %arg3[%0] : memref<2xf32, #tpu.memory_space<smem>>
    %c0 = arith.constant 0 : index
    %c0_0 = arith.constant 0 : index
    %c0_1 = arith.constant 0 : index
    %2 = vector.load %arg4[%c0, %c0_0, %c0_1] : memref<1x1x256xf32, #tpu.memory_space<vmem>>, vector<1x1x256xf32>
    %3 = vector.broadcast %1 : f32 to vector<1x1x256xf32>
    %4 = arith.mulf %2, %3 : vector<1x1x256xf32>
    %c0_2 = arith.constant 0 : index
    %c0_3 = arith.constant 0 : index
    %c0_4 = arith.constant 0 : index
    %5 = vector.load %arg5[%c0_2, %c0_3, %c0_4] : memref<1x1x256xf32, #tpu.memory_space<vmem>>, vector<1x1x256xf32>
    tpu.vector_store %arg5[%c0_2, %c0_3, %c0_4], %4 {strides = array<i32>} : memref<1x1x256xf32, #tpu.memory_space<vmem>>, vector<1x1x256xf32>,
    return
  }
  func.func @transform_0(%arg0: i32, %arg1: i32, %arg2: memref<2xi32, #tpu.memory_space<smem>>, %arg3: memref<2xf32, #tpu.memory_space<smem>>) -> (i32, i32, i32) {
    %0 = arith.index_cast %arg0 : i32 to index
    %1 = memref.load %arg2[%0] : memref<2xi32, #tpu.memory_space<smem>>
    %2 = arith.muli %arg1, %1 : i32
    %c0_i32 = arith.constant 0 : i32
    %c0_i32_0 = arith.constant 0 : i32
    return %arg0, %2, %c0_i32 : i32, i32, i32
  }
  func.func @transform_1(%arg0: i32, %arg1: i32, %arg2: memref<2xi32, #tpu.memory_space<smem>>, %arg3: memref<2xf32, #tpu.memory_space<smem>>) -> (i32, i32, i32) {
    %c0_i32 = arith.constant 0 : i32
    %c0_i32_0 = arith.constant 0 : i32
    return %arg0, %arg1, %c0_i32 : i32, i32, i32
  }
}

</mosaic_0001>

<llo_original>
// kernel: tpu_custom_call.1
$region0: #{tpu_custom_call.1}
  #allocation0 [shape = 'u32[]', space=smem, size = 0x4, offset = 0x4, fixed_abs, tag = 'smem constant byte address 0x4 - core index']
  #allocation1 [shape = 'u32[144,128]{1,0:T(1,128)}', space=vmem, size = 0x12000, scoped, tag = 'internal scratch']
  #allocation2 [shape = 's32[1]{0}', space=sflag, size = 0x4, scoped, tag = 'scoped memory for tpu_custom_call.1']
  #allocation3 [shape = 'u8[512]{0}', space=smem, size = 0x200, scoped, tag = 'prefetched SMEM operand 0']
  #allocation4 [shape = 'u8[512]{0}', space=smem, size = 0x200, scoped, tag = 'prefetched SMEM operand 1']
  %s0 = inlined_call_operand.hbm [shape: s32[2], index: 0, kind: input, shape index: {}]
  %s1 = inlined_call_operand.vmem [shape: f32[2], index: 1, kind: input, shape index: {}]
  %s2 = inlined_call_operand.vmem [shape: f32[2,1,256], index: 2, kind: input, shape index: {}]
  %s3 = inlined_call_operand.hbm [shape: f32[2,1,256], index: 3, kind: output, shape index: {}]
  %s4 = sld [smem:[#allocation0]]
  $region37: #{tpu_custom_call.1} parent=0
    _
  %s6 = ssub.s32 1, %s4
  %s7 = scalar_select 0, %s6, %s4
  %9 = dma.hbm_to_smem %s0, 16, [#allocation3], [#allocation2]
  %s10 = sshll.u32 %s1, 4
  %s11 = int_to_ptr.vmem [resolvable:$true] %s10
  %13 = dma.vmem_to_smem %s11, 16, [#allocation4], [#allocation2]
  %14 = dma.done [#allocation2], 32
  %15 = sfence
  $region1: #{tpu_custom_call.1} parent=0
    #allocation5 [shape = 'u8[2048]{0}', space=vmem, size = 0x800, scoped, tag = 'output window, operand 0']
    #allocation6 [shape = 's32[2]{0}', space=sflag, size = 0x8, scoped, tag = 'scoped memory for tpu_custom_call.1']
    %16 = vsyncpa [#allocation6], 0
    %s17 = scalar_lea.sflag [#allocation6], 1
    %18 = vsyncpa %s17, 0
    loop: start=0, step=1, limit=4
    $region2: #{tpu_custom_call.1} parent=1 // loop_pre_header
      _
    $region3: #{tpu_custom_call.1} parent=1 // loop_header
      %s20 = sphi 0, %s24
      %p21 = scmp.ge.s32.totalorder %s20, 4
      %s27 = sphi 0, %s39
      %s28 = sphi 0, %s35
      %s29 = sphi 0, %s27
      %s30 = sphi 0, %s28
      %s31 = sphi 0, %s29
      %s32 = sphi 0, %s30
      %s48 = sphi 0, %s50
      %s51 = sphi 0, %s48
      %s52 = sphi 0, %s51
      %s68 = sphi 0, %s52
      %s76 = sphi 0, %s78
      %s79 = sphi 0, %s76
      %s80 = sphi 0, %s79
      %s96 = sphi 0, %s80
    $region4: #{tpu_custom_call.1} parent=1 // loop_header_branch
      %23 = sbr.rel (%p21) target = $region8
    $region5: #{tpu_custom_call.1} parent=1 // loop_body
      %s25 = ssub.s32 %s20, 1
      %s26 = ssub.s32 %s20, 2
      %s33 = sadd.s32 1, %s28
      %p34 = scmp.ge.s32.totalorder %s33, 1
      %s35 = scalar_select %p34, 0, %s33
      %s36 = sadd.s32 1, %s27
      %s37 = scalar_select %p34, %s36, %s27
      %p38 = scmp.ge.s32.totalorder %s37, 2
      %s39 = scalar_select %p38, 0, %s37
      %s40 = sld [smem:[#allocation3 + %s27]]
      %s41 = smul.u32 %s28, %s40
      %s42 = sld [smem:[#allocation3 + %s39]]
      %s43 = smul.u32 %s35, %s42
      %s44 = ssub.s32 %s27, %s39
      %s45 = ssub.s32 %s41, %s43
      %s46 = sor.u32 %s44, %s45
      %p47 = scmp.eq.s32.totalorder %s46, 0
      %s49 = sadd.s32 %s48, 1
      %s50 = scalar_select %p47, %s48, %s49
      %p53 = pneg %p47
      %p54 = scmp.eq.s32.totalorder %s20, 1
      %p55 = por %p53, %p54
      %p56 = scmp.ne.s32.totalorder %s48, %s51
      %p57 = scmp.eq.s32.totalorder %s20, 0
      %p58 = por %p56, %p57
      %p59 = scmp.ne.s32.totalorder %s48, %s51
      %p60 = scmp.eq.s32.totalorder %s25, 1
      %p61 = por %p59, %p60
      %p62 = scmp.ne.s32.totalorder %s51, %s52
      %p63 = scmp.eq.s32.totalorder %s25, 0
      %p64 = por %p62, %p63
      %p65 = scmp.ne.s32.totalorder %s51, %s52
      %p66 = scmp.eq.s32.totalorder %s26, 1
      %p67 = por %p65, %p66
      %p69 = scmp.ne.s32.totalorder %s52, %s68
      %p70 = scmp.eq.s32.totalorder %s26, 0
      %p71 = por %p69, %p70
      %s72 = ssub.s32 %s27, %s39
      %s73 = ssub.s32 %s28, %s35
      %s74 = sor.u32 %s72, %s73
      %p75 = scmp.eq.s32.totalorder %s74, 0
      %s77 = sadd.s32 %s76, 1
      %s78 = scalar_select %p75, %s76, %s77
      %p81 = pneg %p75
      %p82 = scmp.eq.s32.totalorder %s20, 1
      %p83 = por %p81, %p82
      %p84 = scmp.ne.s32.totalorder %s76, %s79
      %p85 = scmp.eq.s32.totalorder %s20, 0
      %p86 = por %p84, %p85
      %p87 = scmp.ne.s32.totalorder %s76, %s79
      %p88 = scmp.eq.s32.totalorder %s25, 1
      %p89 = por %p87, %p88
      %p90 = scmp.ne.s32.totalorder %s79, %s80
      %p91 = scmp.eq.s32.totalorder %s25, 0
      %p92 = por %p90, %p91
      %p93 = scmp.ne.s32.totalorder %s79, %s80
      %p94 = scmp.eq.s32.totalorder %s26, 1
      %p95 = por %p93, %p94
      %p97 = scmp.ne.s32.totalorder %s80, %s96
      %p98 = scmp.eq.s32.totalorder %s26, 0
      %p99 = por %p97, %p98
      %p100 = scmp.le.s32.totalorder 1, %s20
      %p101 = scmp.lt.s32.totalorder %s20, 3
      %p102 = pnand %p100, %p101
      %p103 = pneg %p102
      // Predicated region
      $region9: #{tpu_custom_call.1} parent=5 // pred_check
        _
      $region10: #{tpu_custom_call.1} parent=5 // pred_check_branch
        %105 = sbr.rel (%p102) target = $region12
      $region11: #{tpu_custom_call.1} parent=5 // pred_region
        %s106 = ssub.s32 %s20, 1
      $region12: #{tpu_custom_call.1} parent=5 // pred_fallthru
        _
      %p107 = scmp.lt.s32.totalorder %s20, 2
      // Predicated region
      $region13: #{tpu_custom_call.1} parent=5 // pred_check
        %p108 = pneg %p107
      $region14: #{tpu_custom_call.1} parent=5 // pred_check_branch
        %110 = sbr.rel (%p108) target = $region16
      $region15: #{tpu_custom_call.1} parent=5 // pred_region
        // Predicated region
        $region17: #{tpu_custom_call.1} parent=15 // pred_check
          %p111 = pneg %p58
        $region18: #{tpu_custom_call.1} parent=15 // pred_check_branch
          %113 = sbr.rel (%p111) target = $region20
        $region19: #{tpu_custom_call.1} parent=15 // pred_region
          %s114 = sld [smem:[#allocation3 + %s27]]
          %s115 = smul.u32 %s28, %s114
          %p116 = scmp.lt.s32.totalorder %s27, 1
          %s117 = scalar_select %p116, %s27, 1
          %p118 = scmp.lt.s32.totalorder %s115, 0
          %s119 = scalar_select %p118, %s115, 0
          %s120 = smul.addr %s119, 2
          %s121 = smul.addr %s117, 2
          %s122 = sadd.s32 %s120, %s121
          %s123 = scalar_lea.vmem %s2, %s122
          %s124 = sld [smem:[#allocation3 + %s27]]
          %s125 = smul.u32 %s28, %s124
        $region20: #{tpu_custom_call.1} parent=15 // pred_fallthru
          _
      $region16: #{tpu_custom_call.1} parent=5 // pred_fallthru
        _
      %p126 = scmp.le.s32.totalorder 1, %s20
      %p127 = scmp.lt.s32.totalorder %s20, 3
      %p128 = pnand %p126, %p127
      %p129 = pneg %p128
      // Predicated region
      $region21: #{tpu_custom_call.1} parent=5 // pred_check
        _
      $region22: #{tpu_custom_call.1} parent=5 // pred_check_branch
        %131 = sbr.rel (%p128) target = $region24
      $region23: #{tpu_custom_call.1} parent=5 // pred_region
        %s132 = ssub.s32 %s20, 1
        %s133 = sld [smem:[#allocation3 + %s29]]
        %s134 = smul.u32 %s30, %s133
        %p135 = scmp.lt.s32.totalorder %s29, 1
        %s136 = scalar_select %p135, %s29, 1
        %p137 = scmp.lt.s32.totalorder %s134, 0
        %s138 = scalar_select %p137, %s134, 0
        %s139 = smul.addr %s138, 2
        %s140 = smul.addr %s136, 2
        %s141 = sadd.s32 %s139, %s140
        %s142 = scalar_lea.vmem %s2, %s141
        %p143 = pneg %p64
        %p144 = pneg %p61
        %p145 = pneg %p92
        %p146 = pneg %p89
        %s147 = sand.u32 %s79, 1
        %s148 = scalar_lea.sflag [#allocation6], %s147
        %s149 = sand.u32 %s79, 1
        %s150 = smul.addr %s149, 2
        %s151 = scalar_lea.vmem [#allocation5], %s150
        %s152 = sld [smem:[#allocation3 + %s29]]
        %s153 = smul.u32 %s30, %s152
        %p154 = scmp.lt.s32.totalorder %s29, 1
        %s155 = scalar_select %p154, %s29, 1
        %p156 = scmp.lt.s32.totalorder %s153, 0
        %s157 = scalar_select %p156, %s153, 0
        %s158 = smul.addr %s157, 2
        %s159 = smul.addr %s155, 2
        %s160 = sadd.s32 %s158, %s159
        %s161 = scalar_lea.vmem %s2, %s160
        %s162 = sld [smem:[#allocation3 + %s29]]
        %s163 = smul.u32 %s30, %s162
        %s164 = sld [smem:[#allocation4 + %s29]]
        %v165 = vld [vmem:[%s161] sm:$0x3]
        %v166 = vstv %s164
        %v167 = vmul.f32 %v165, %v166
        %v168 = vlaneseq
        %vm169 = vcmp.ge.s32.totalorder %v168, 0
        %vm170 = vcmp.lt.s32.totalorder %v168, 256
        %vm171 = vmand %vm169, %vm170
        %172 = vst.msk [vmem:[%s151] sm:$0x3] %vm171, %v167
        %s173 = sand.u32 %s79, 1
        %s174 = scalar_lea.sflag [#allocation6], %s173
        %s175 = sand.u32 %s79, 1
        %s176 = smul.addr %s175, 2
        %s177 = scalar_lea.vmem [#allocation5], %s176
        // Predicated region
        $region25: #{tpu_custom_call.1} parent=23 // pred_check
          %p178 = pneg %p89
        $region26: #{tpu_custom_call.1} parent=23 // pred_check_branch
          %180 = sbr.rel (%p178) target = $region28
        $region27: #{tpu_custom_call.1} parent=23 // pred_region
          %s182 = ssub.s32 32, 32
          %183 = vsyncadd %s174, %s182
          %s184 = smul.addr %s30, 2
          %s185 = smul.addr %s29, 2
          %s186 = sadd.s32 %s184, %s185
          %s187 = smul.addr %s186, 16
          %s188 = scalar_lea.hbm %s3, %s187
          %s190 = sshll.u32 %s177, 4
          %s191 = int_to_ptr.vmem [resolvable:$true] %s190
          %193 = dma.vmem_to_hbm [thread:$0]  %s191, 32, %s188, %s174
        $region28: #{tpu_custom_call.1} parent=23 // pred_fallthru
          _
      $region24: #{tpu_custom_call.1} parent=5 // pred_fallthru
        _
      %p194 = scmp.le.s32.totalorder 2, %s20
      // Predicated region
      $region29: #{tpu_custom_call.1} parent=5 // pred_check
        %p195 = pneg %p194
      $region30: #{tpu_custom_call.1} parent=5 // pred_check_branch
        %197 = sbr.rel (%p195) target = $region32
      $region31: #{tpu_custom_call.1} parent=5 // pred_region
        %s198 = ssub.s32 %s20, 2
        // Predicated region
        $region33: #{tpu_custom_call.1} parent=31 // pred_check
          %p199 = pneg %p95
        $region34: #{tpu_custom_call.1} parent=31 // pred_check_branch
          %201 = sbr.rel (%p199) target = $region36
        $region35: #{tpu_custom_call.1} parent=31 // pred_region
          %s202 = sand.u32 %s80, 1
          %s203 = scalar_lea.sflag [#allocation6], %s202
          %s204 = sand.u32 %s80, 1
          %s205 = smul.addr %s204, 2
          %s206 = scalar_lea.vmem [#allocation5], %s205
          %207 = dma.done %s203, 32
        $region36: #{tpu_custom_call.1} parent=31 // pred_fallthru
          _
      $region32: #{tpu_custom_call.1} parent=5 // pred_fallthru
        _
    $region6: #{tpu_custom_call.1} parent=1 // loop_footer
      %s24 = sadd.s32 1, %s20
    $region7: #{tpu_custom_call.1} parent=1 // loop_footer_branch
      %19 = sbr.rel target = $region3
    $region8: #{tpu_custom_call.1} parent=1 // loop_exit
      _
    %208 = vsyncpa [#allocation6], 1
    %s209 = scalar_lea.sflag [#allocation6], 1
    %210 = vsyncpa %s209, 1

</llo_original>
